<compile_context>
chip_gen: v7x
topology: tpu7x:2x2x1
jax: 0.10.0
libtpu: 0.0.40
codegen_flags: <defaults>
</compile_context>

<pallas_src>
import functools
import numpy as np
import jax
import jax.numpy as jnp
from jax.experimental import pallas as pl
from jax.experimental.pallas import tpu as pltpu


def _gate_kernel(scalars_dim, gates_dim, c_scalar, c_gate,
                 feat_ref, expand_ref, out_ref):
    S, G = scalars_dim, gates_dim

    # Static ref slices (zero-cost views of the VMEM tile); upcast once to f32.
    gates = feat_ref[:, S:S + G].astype(jnp.float32)
    gated = feat_ref[:, S + G:].astype(jnp.float32)

    # Activation(irreps_gates, [sigmoid]) (normalize2mom constant folded in)
    gate_act = c_gate * jax.nn.sigmoid(gates)

    # o3.ElementwiseTensorProduct(irreps_gated, irreps_gates): broadcast each gate
    # scalar over its irrep's (2l+1) slots via a constant 0/1 expansion matrix.
    gate_exp = jnp.dot(gate_act, expand_ref[...], preferred_element_type=jnp.float32)

    if S > 0:
        # Activation(irreps_scalars, [silu]) (normalize2mom constant folded in)
        scalars = feat_ref[:, :S].astype(jnp.float32)
        out_ref[:, :S] = (c_scalar * (scalars * jax.nn.sigmoid(scalars))).astype(out_ref.dtype)
    out_ref[:, S:] = (gated * gate_exp).astype(out_ref.dtype)


def gate_forward(features, expand, *, scalars_dim, gates_dim, c_scalar, c_gate,
                 block_n=512):
    N, D = features.shape
    gated_dim = D - scalars_dim - gates_dim
    out_dim = scalars_dim + gated_dim

    if gates_dim == 0:
        # No gates implies no gated irreps (e3nn constraint) -> output is just act(scalars).
        assert gated_dim == 0
        # TODO(synk): gate-free branch (`features = scalars`) kept in plain JAX.
        return (c_scalar * (features * jax.nn.sigmoid(features))).astype(features.dtype)

    # Row tile: keep (in block + out block) * double-buffers small vs VMEM (v7x: 64 MiB).
    tn = min(block_n, N)
    if tn != N and tn % 8 != 0:
        tn = max(8, (tn // 8) * 8)          # sublane alignment when not covering full N
    grid = (pl.cdiv(N, tn),)

    kernel = functools.partial(_gate_kernel, scalars_dim, gates_dim,
                               float(c_scalar), float(c_gate))
    return pl.pallas_call(
        kernel,
        out_shape=jax.ShapeDtypeStruct((N, out_dim), features.dtype),
        grid_spec=pl.GridSpec(
            grid=grid,
            in_specs=[
                pl.BlockSpec((tn, D), lambda i: (i, 0)),                    # features rows
                pl.BlockSpec((gates_dim, gated_dim), lambda i: (0, 0)),     # expand, VMEM-resident
            ],
            out_specs=pl.BlockSpec((tn, out_dim), lambda i: (i, 0)),
        ),
        compiler_params=pltpu.CompilerParams(
            dimension_semantics=("parallel",),          # shards rows across TCs on v7x
            vmem_limit_bytes=64 * 1024 * 1024,
        ),
    )(features, expand)


def build_expand(irreps_gated):
    """0/1 matrix (num_gates, gated_dim): row g is 1 over the (2l+1) slots of irrep g."""
    num = sum(mul for mul, _ in irreps_gated)
    dim = sum(mul * (2 * l + 1) for mul, l in irreps_gated)
    E = np.zeros((num, dim), dtype=np.float32)
    g, c = 0, 0
    for mul, l in irreps_gated:
        d = 2 * l + 1
        for _ in range(mul):
            E[g, c:c + d] = 1.0
            g += 1
            c += d
    return jnp.asarray(E)


if __name__ == "__main__":
    # Module config (synthetic, deterministic):
    #   irreps_scalars = "8x0e"  with act_scalars = [silu]
    #   irreps_gates   = "8x0e"  with act_gates   = [sigmoid]
    #   irreps_gated   = "4x1e + 4x2e"  (8 irreps -> matches 8 gate scalars)
    irreps_gated = [(4, 1), (4, 2)]
    scalars_dim, gates_dim = 8, 8
    gated_dim = sum(mul * (2 * l + 1) for mul, l in irreps_gated)  # 32
    D = scalars_dim + gates_dim + gated_dim                        # 48
    N = 64                                                         # small demo node count

    features = jax.random.normal(jax.random.PRNGKey(0), (N, D), dtype=jnp.float32)

    # e3nn `normalize2mom` constants (deterministic Monte-Carlo estimate over N(0,1)).
    z = jax.random.normal(jax.random.PRNGKey(1), (1_000_000,), dtype=jnp.float32)
    c_scalar = float(jnp.mean((z * jax.nn.sigmoid(z)) ** 2) ** -0.5)  # silu
    c_gate = float(jnp.mean(jax.nn.sigmoid(z) ** 2) ** -0.5)          # sigmoid

    expand = build_expand(irreps_gated)

    out = gate_forward(features, expand,
                       scalars_dim=scalars_dim, gates_dim=gates_dim,
                       c_scalar=c_scalar, c_gate=c_gate,
                       block_n=32)                                   # grid of 2 tiles
    out = jax.block_until_ready(out)

    # pure-JAX reference
    scalars = features[:, :scalars_dim]
    gates = features[:, scalars_dim:scalars_dim + gates_dim]
    gated = features[:, scalars_dim + gates_dim:]
    ref = jnp.concatenate([
        c_scalar * scalars * jax.nn.sigmoid(scalars),
        gated * ((c_gate * jax.nn.sigmoid(gates)) @ expand),
    ], axis=-1)

    assert out.shape == (N, scalars_dim + gated_dim)
    assert jnp.allclose(out, ref, atol=1e-5, rtol=1e-5)
    print("KERNEL_OK")
</pallas_src>

<mosaic_0001>
module attributes {stable_mosaic.version = 11 : i64} {
  func.func @_gate_kernel(%arg0: i32, %arg1: memref<32x48xf32, #tpu.memory_space<vmem>>, %arg2: memref<8x32xf32, #tpu.memory_space<vmem>>, %arg3: memref<32x40xf32, #tpu.memory_space<vmem>>) attributes {dimension_semantics = [#tpu.dimension_semantics<parallel>], iteration_bounds = array<i64: 2>, scalar_prefetch = 0 : i64, scratch_operands = 0 : i64, tpu.core_type = #tpu.core_type<tc>, window_params = [{transform_indices = @transform_0, window_bounds = array<i64: 32, 48>}, {pipeline_mode = #tpu.pipeline_mode<synchronous>, transform_indices = @transform_1, window_bounds = array<i64: 8, 32>}, {transform_indices = @transform_2, window_bounds = array<i64: 32, 40>}]} {
    %c0 = arith.constant 0 : index
    %c8 = arith.constant 8 : index
    %0 = vector.load %arg1[%c0, %c8] : memref<32x48xf32, #tpu.memory_space<vmem>>, vector<32x8xf32>
    %c0_0 = arith.constant 0 : index
    %c16 = arith.constant 16 : index
    %1 = vector.load %arg1[%c0_0, %c16] : memref<32x48xf32, #tpu.memory_space<vmem>>, vector<32x32xf32>
    %2 = arith.negf %0 : vector<32x8xf32>
    %3 = math.exp %2 : vector<32x8xf32>
    %cst = arith.constant 1.000000e+00 : f32
    %4 = vector.broadcast %cst : f32 to vector<32x8xf32>
    %5 = arith.addf %4, %3 : vector<32x8xf32>
    %6 = arith.divf %4, %5 : vector<32x8xf32>
    %cst_1 = arith.constant 1.845824 : f32
    %7 = vector.broadcast %cst_1 : f32 to vector<32x8xf32>
    %8 = arith.mulf %7, %6 : vector<32x8xf32>
    %c0_2 = arith.constant 0 : index
    %c0_3 = arith.constant 0 : index
    %9 = vector.load %arg2[%c0_2, %c0_3] : memref<8x32xf32, #tpu.memory_space<vmem>>, vector<8x32xf32>
    %cst_4 = arith.constant dense<0.000000e+00> : vector<32x32xf32>
    %10 = tpu.matmul %8, %9, %cst_4 {dimension_numbers = #tpu.dot_dimension_numbers<[1], [0], [0], [1], [0, 0, 1, 1], [], []>} : vector<32x8xf32>, vector<8x32xf32>, vector<32x32xf32> -> vector<32x32xf32>
    %c0_5 = arith.constant 0 : index
    %c0_6 = arith.constant 0 : index
    %11 = vector.load %arg1[%c0_5, %c0_6] : memref<32x48xf32, #tpu.memory_space<vmem>>, vector<32x8xf32>
    %12 = arith.negf %11 : vector<32x8xf32>
    %13 = math.exp %12 : vector<32x8xf32>
    %cst_7 = arith.constant 1.000000e+00 : f32
    %14 = vector.broadcast %cst_7 : f32 to vector<32x8xf32>
    %15 = arith.addf %14, %13 : vector<32x8xf32>
    %16 = arith.divf %14, %15 : vector<32x8xf32>
    %17 = arith.mulf %11, %16 : vector<32x8xf32>
    %cst_8 = arith.constant 1.6766355 : f32
    %18 = vector.broadcast %cst_8 : f32 to vector<32x8xf32>
    %19 = arith.mulf %18, %17 : vector<32x8xf32>
    %c0_9 = arith.constant 0 : index
    %c0_10 = arith.constant 0 : index
    %20 = vector.load %arg3[%c0_9, %c0_10] : memref<32x40xf32, #tpu.memory_space<vmem>>, vector<32x8xf32>
    tpu.vector_store %arg3[%c0_9, %c0_10], %19 {strides = array<i32>} : memref<32x40xf32, #tpu.memory_space<vmem>>, vector<32x8xf32>,
    %21 = arith.mulf %1, %10 : vector<32x32xf32>
    %c0_11 = arith.constant 0 : index
    %c8_12 = arith.constant 8 : index
    %22 = vector.load %arg3[%c0_11, %c8_12] : memref<32x40xf32, #tpu.memory_space<vmem>>, vector<32x32xf32>
    tpu.vector_store %arg3[%c0_11, %c8_12], %21 {strides = array<i32>} : memref<32x40xf32, #tpu.memory_space<vmem>>, vector<32x32xf32>,
    return
  }
  func.func @transform_0(%arg0: i32) -> (i32, i32) {
    %c0_i32 = arith.constant 0 : i32
    %c0_i32_0 = arith.constant 0 : i32
    return %arg0, %c0_i32 : i32, i32
  }
  func.func @transform_1(%arg0: i32) -> (i32, i32) {
    %c0_i32 = arith.constant 0 : i32
    %c0_i32_0 = arith.constant 0 : i32
    %c0_i32_1 = arith.constant 0 : i32
    return %c0_i32, %c0_i32_0 : i32, i32
  }
  func.func @transform_2(%arg0: i32) -> (i32, i32) {
    %c0_i32 = arith.constant 0 : i32
    %c0_i32_0 = arith.constant 0 : i32
    return %arg0, %c0_i32 : i32, i32
  }
}

</mosaic_0001>

<llo_original>
// kernel: tpu_custom_call.1
$region0: #{tpu_custom_call.1}
  #allocation0 [shape = 'u32[]', space=smem, size = 0x4, offset = 0x4, fixed_abs, tag = 'smem constant byte address 0x4 - core index']
  #allocation1 [shape = 'u32[144,128]{1,0:T(1,128)}', space=vmem, size = 0x12000, scoped, tag = 'internal scratch']
  %s0 = inlined_call_operand.hbm [shape: f32[64,48], index: 0, kind: input, shape index: {}]
  %s1 = inlined_call_operand.hbm [shape: f32[8,32], index: 1, kind: input, shape index: {}]
  %s2 = inlined_call_operand.hbm [shape: f32[64,40], index: 2, kind: output, shape index: {}]
  %s3 = sld [smem:[#allocation0]]
  $region49: #{tpu_custom_call.1} parent=0
    _
  %s5 = ssub.s32 1, %s3
  %s6 = scalar_select 0, %s5, %s3
  $region1: #{tpu_custom_call.1} parent=0
    #allocation2 [shape = 'u8[32768]{0}', space=vmem, size = 0x8000, scoped, tag = 'input window, operand 0']
    #allocation3 [shape = 's32[2]{0}', space=sflag, size = 0x8, scoped, tag = 'scoped memory for tpu_custom_call.1']
    #allocation4 [shape = 's32[2]{0}', space=sflag, size = 0x8, scoped, tag = 'scoped memory for tpu_custom_call.1']
    #allocation5 [shape = 'u8[4096]{0}', space=vmem, size = 0x1000, scoped, tag = 'input window, operand 1, single buffered']
    #allocation6 [shape = 's32[1]{0}', space=sflag, size = 0x4, scoped, tag = 'scoped memory for tpu_custom_call.1']
    #allocation7 [shape = 'u8[32768]{0}', space=vmem, size = 0x8000, scoped, tag = 'output window, operand 0']
    %7 = vsyncpa [#allocation3], 0
    %s8 = scalar_lea.sflag [#allocation3], 1
    %9 = vsyncpa %s8, 0
    %10 = vsyncpa [#allocation6], 0
    %11 = vsyncpa [#allocation4], 0
    %s12 = scalar_lea.sflag [#allocation4], 1
    %13 = vsyncpa %s12, 0
    loop: start=0, step=1, limit=4
    $region2: #{tpu_custom_call.1} parent=1 // loop_pre_header
      _
    $region3: #{tpu_custom_call.1} parent=1 // loop_header
      %s15 = sphi 0, %s19
      %p16 = scmp.ge.s32.totalorder %s15, 4
      %s25 = sphi 0, %s27
      %s28 = sphi 0, %s25
      %s29 = sphi 0, %s28
      %s45 = sphi 0, %s29
      %s49 = sphi 0, %s49
      %s51 = sphi 0, %s49
      %s52 = sphi 0, %s51
      %s66 = sphi 0, %s52
      %s72 = sphi 0, %s74
      %s75 = sphi 0, %s72
      %s76 = sphi 0, %s75
      %s92 = sphi 0, %s76
    $region4: #{tpu_custom_call.1} parent=1 // loop_header_branch
      %18 = sbr.rel (%p16) target = $region8
    $region5: #{tpu_custom_call.1} parent=1 // loop_body
      %s20 = ssub.s32 %s15, 1
      %s21 = ssub.s32 %s15, 2
      %s22 = sadd.s32 %s15, 1
      %s23 = ssub.s32 %s15, %s22
      %p24 = scmp.eq.s32.totalorder %s23, 0
      %s26 = sadd.s32 %s25, 1
      %s27 = scalar_select %p24, %s25, %s26
      %p30 = pneg %p24
      %p31 = scmp.eq.s32.totalorder %s15, 1
      %p32 = por %p30, %p31
      %p33 = scmp.ne.s32.totalorder %s25, %s28
      %p34 = scmp.eq.s32.totalorder %s15, 0
      %p35 = por %p33, %p34
      %p36 = scmp.ne.s32.totalorder %s25, %s28
      %p37 = scmp.eq.s32.totalorder %s20, 1
      %p38 = por %p36, %p37
      %p39 = scmp.ne.s32.totalorder %s28, %s29
      %p40 = scmp.eq.s32.totalorder %s20, 0
      %p41 = por %p39, %p40
      %p42 = scmp.ne.s32.totalorder %s28, %s29
      %p43 = scmp.eq.s32.totalorder %s21, 1
      %p44 = por %p42, %p43
      %p46 = scmp.ne.s32.totalorder %s29, %s45
      %p47 = scmp.eq.s32.totalorder %s21, 0
      %p48 = por %p46, %p47
      %s50 = sadd.s32 %s49, 1
      %p53 = scmp.eq.s32.totalorder %s15, 1
      %p54 = scmp.ne.s32.totalorder %s49, %s51
      %p55 = scmp.eq.s32.totalorder %s15, 0
      %p56 = por %p54, %p55
      %p57 = scmp.ne.s32.totalorder %s49, %s51
      %p58 = scmp.eq.s32.totalorder %s20, 1
      %p59 = por %p57, %p58
      %p60 = scmp.ne.s32.totalorder %s51, %s52
      %p61 = scmp.eq.s32.totalorder %s20, 0
      %p62 = por %p60, %p61
      %p63 = scmp.ne.s32.totalorder %s51, %s52
      %p64 = scmp.eq.s32.totalorder %s21, 1
      %p65 = por %p63, %p64
      %p67 = scmp.ne.s32.totalorder %s52, %s66
      %p68 = scmp.eq.s32.totalorder %s21, 0
      %p69 = por %p67, %p68
      %s70 = ssub.s32 %s15, %s22
      %p71 = scmp.eq.s32.totalorder %s70, 0
      %s73 = sadd.s32 %s72, 1
      %s74 = scalar_select %p71, %s72, %s73
      %p77 = pneg %p71
      %p78 = scmp.eq.s32.totalorder %s15, 1
      %p79 = por %p77, %p78
      %p80 = scmp.ne.s32.totalorder %s72, %s75
      %p81 = scmp.eq.s32.totalorder %s15, 0
      %p82 = por %p80, %p81
      %p83 = scmp.ne.s32.totalorder %s72, %s75
      %p84 = scmp.eq.s32.totalorder %s20, 1
      %p85 = por %p83, %p84
      %p86 = scmp.ne.s32.totalorder %s75, %s76
      %p87 = scmp.eq.s32.totalorder %s20, 0
      %p88 = por %p86, %p87
      %p89 = scmp.ne.s32.totalorder %s75, %s76
      %p90 = scmp.eq.s32.totalorder %s21, 1
      %p91 = por %p89, %p90
      %p93 = scmp.ne.s32.totalorder %s76, %s92
      %p94 = scmp.eq.s32.totalorder %s21, 0
      %p95 = por %p93, %p94
      %p96 = scmp.le.s32.totalorder 1, %s15
      %p97 = scmp.lt.s32.totalorder %s15, 3
      %p98 = pnand %p96, %p97
      %p99 = pneg %p98
      // Predicated region
      $region9: #{tpu_custom_call.1} parent=5 // pred_check
        _
      $region10: #{tpu_custom_call.1} parent=5 // pred_check_branch
        %101 = sbr.rel (%p98) target = $region12
      $region11: #{tpu_custom_call.1} parent=5 // pred_region
        %s102 = ssub.s32 %s15, 1
        // Predicated region
        $region13: #{tpu_custom_call.1} parent=11 // pred_check
          %p103 = pneg %p62
        $region14: #{tpu_custom_call.1} parent=11 // pred_check_branch
          %105 = sbr.rel (%p103) target = $region16
        $region15: #{tpu_custom_call.1} parent=11 // pred_region
          %s107 = ssub.s32 128, 128
          %108 = vsyncadd [#allocation6], %s107
          %s110 = sshll.u32 [#allocation5], 4
          %s111 = int_to_ptr.vmem [resolvable:$true] %s110
          %113 = dma.hbm_to_vmem [thread:$0]  %s1, 128, %s111, [#allocation6]
        $region16: #{tpu_custom_call.1} parent=11 // pred_fallthru
          _
      $region12: #{tpu_custom_call.1} parent=5 // pred_fallthru
        _
      %p114 = scmp.lt.s32.totalorder %s15, 2
      // Predicated region
      $region17: #{tpu_custom_call.1} parent=5 // pred_check
        %p115 = pneg %p114
      $region18: #{tpu_custom_call.1} parent=5 // pred_check_branch
        %117 = sbr.rel (%p115) target = $region20
      $region19: #{tpu_custom_call.1} parent=5 // pred_region
        // Predicated region
        $region21: #{tpu_custom_call.1} parent=19 // pred_check
          %p118 = pneg %p35
        $region22: #{tpu_custom_call.1} parent=19 // pred_check_branch
          %120 = sbr.rel (%p118) target = $region24
        $region23: #{tpu_custom_call.1} parent=19 // pred_region
          %s121 = sand.u32 %s25, 1
          %s122 = scalar_lea.sflag [#allocation3], %s121
          %s123 = sand.u32 %s25, 1
          %s124 = smul.addr %s123, 32
          %s125 = scalar_lea.vmem [#allocation2], %s124
          %s126 = smul.u32 4, %s15
          %s128 = ssub.s32 512, 512
          %129 = vsyncadd %s122, %s128
          %s130 = smul.addr %s126, 128
          %s131 = scalar_lea.hbm %s0, %s130
          %s132 = sshll.u32 %s125, 4
          %s133 = int_to_ptr.vmem [resolvable:$true] %s132
          %138 = dma.hbm_to_vmem [thread:$0]  %s131, 512, %s133, %s122, 128, 128, 8
        $region24: #{tpu_custom_call.1} parent=19 // pred_fallthru
          _
      $region20: #{tpu_custom_call.1} parent=5 // pred_fallthru
        _
      %p139 = scmp.le.s32.totalorder 1, %s15
      %p140 = scmp.lt.s32.totalorder %s15, 3
      %p141 = pnand %p139, %p140
      %p142 = pneg %p141
      // Predicated region
      $region25: #{tpu_custom_call.1} parent=5 // pred_check
        _
      $region26: #{tpu_custom_call.1} parent=5 // pred_check_branch
        %144 = sbr.rel (%p141) target = $region28
      $region27: #{tpu_custom_call.1} parent=5 // pred_region
        %s145 = ssub.s32 %s15, 1
        %s146 = sand.u32 %s28, 1
        %s147 = scalar_lea.sflag [#allocation3], %s146
        %s148 = sand.u32 %s28, 1
        %s149 = smul.addr %s148, 32
        %s150 = scalar_lea.vmem [#allocation2], %s149
        // Predicated region
        $region29: #{tpu_custom_call.1} parent=27 // pred_check
          %p151 = pneg %p41
        $region30: #{tpu_custom_call.1} parent=27 // pred_check_branch
          %153 = sbr.rel (%p151) target = $region32
        $region31: #{tpu_custom_call.1} parent=27 // pred_region
          %154 = dma.done %s147, 512
        $region32: #{tpu_custom_call.1} parent=27 // pred_fallthru
          _
        // Predicated region
        $region33: #{tpu_custom_call.1} parent=27 // pred_check
          %p155 = pneg %p62
        $region34: #{tpu_custom_call.1} parent=27 // pred_check_branch
          %157 = sbr.rel (%p155) target = $region36
        $region35: #{tpu_custom_call.1} parent=27 // pred_region
          %158 = dma.done [#allocation6], 128
        $region36: #{tpu_custom_call.1} parent=27 // pred_fallthru
          _
        %s159 = sand.u32 %s28, 1
        %s160 = scalar_lea.sflag [#allocation3], %s159
        %s161 = sand.u32 %s28, 1
        %s162 = smul.addr %s161, 32
        %s163 = scalar_lea.vmem [#allocation2], %s162
        %p164 = pneg %p41
        %p165 = pneg %p38
        %p166 = pneg %p62
        %p167 = pneg %p59
        %p168 = pneg %p88
        %p169 = pneg %p85
        %s170 = sand.u32 %s75, 1
        %s171 = scalar_lea.sflag [#allocation4], %s170
        %s172 = sand.u32 %s75, 1
        %s173 = smul.addr %s172, 32
        %s174 = scalar_lea.vmem [#allocation7], %s173
        %s175 = smul.u32 4, %s20
        %s176 = smul.u32 4, %s20
        %v177 = vld [vmem:[%s150] sm:$0xff]
        %v178 = vld [vmem:[%s150 + $0x8] sm:$0xff]
        %v179 = vld [vmem:[%s150 + $0x10] sm:$0xff]
        %v180 = vld [vmem:[%s150 + $0x18] sm:$0xff]
        %v181 = vxor.u32 %v177, 2147483648
        %v182 = vxor.u32 %v178, 2147483648
        %v183 = vxor.u32 %v179, 2147483648
        %v184 = vxor.u32 %v180, 2147483648
        %v185 = vmul.f32 %v181, 1.442695
        %v186 = vpow.pop %v185
        %v187 = vmul.f32 %v182, 1.442695
        %v188 = vpow.pop %v187
        %v189 = vmul.f32 %v183, 1.442695
        %v190 = vpow.pop %v189
        %v191 = vmul.f32 %v184, 1.442695
        %v192 = vpow.pop %v191
        %v193 = vadd.f32 %v186, 1.0
        %v194 = vadd.f32 %v188, 1.0
        %v195 = vadd.f32 %v190, 1.0
        %v196 = vadd.f32 %v192, 1.0
        %v197 = vrcp.pop %v193
        %v198 = vmul.f32 1.0, %v197
        %v199 = vrcp.pop %v194
        %v200 = vmul.f32 1.0, %v199
        %v201 = vrcp.pop %v195
        %v202 = vmul.f32 1.0, %v201
        %v203 = vrcp.pop %v196
        %v204 = vmul.f32 1.0, %v203
        %v205 = vmul.f32 %v198, 1.845824
        %v206 = vmul.f32 %v200, 1.845824
        %v207 = vmul.f32 %v202, 1.845824
        %v208 = vmul.f32 %v204, 1.845824
        %v209 = vld [vmem:[#allocation5] sm:$0xff]
        %214 = vrot.lane.b32.xlu0 %v205, 120
        %v215 = vpop.permute.xlu0 %214
        %216 = vrot.lane.b32.xlu0 %v206, 120
        %v217 = vpop.permute.xlu0 %216
        %218 = vrot.lane.b32.xlu0 %v207, 120
        %v219 = vpop.permute.xlu0 %218
        %220 = vrot.lane.b32.xlu0 %v208, 120
        %v221 = vpop.permute.xlu0 %220
        %vm222 = vcmask 64512
        %v223 = vsel %vm222, %v215, 0
        %v225 = vsel %vm222, %v217, 0
        %v227 = vsel %vm222, %v219, 0
        %v229 = vsel %vm222, %v221, 0
        %231 = vmatprep.subr.mxu0 0.0
        %232 = vmatpush1.msra.mxu0 %v209
        %233 = vmatprep.subr.mxu0 0.0
        %234 = vmatpush1.msra.mxu0 0.0
        %235 = vmatprep.subr.mxu0 0.0
        %236 = vmatpush1.msra.mxu0 0.0
        %237 = vmatprep.subr.mxu0 0.0
        %238 = vmatpush1.msra.mxu0 0.0
        %239 = vmatprep.subr.mxu0 0.0
        %240 = vmatpush1.msra.mxu0 0.0
        %241 = vmatprep.subr.mxu0 0.0
        %242 = vmatpush1.msra.mxu0 0.0
        %243 = vmatprep.subr.mxu0 0.0
        %244 = vmatpush1.msra.mxu0 0.0
        %245 = vmatprep.subr.mxu0 0.0
        %246 = vmatpush1.msra.mxu0 0.0
        %247 = vmatprep.subr.mxu0 0.0
        %248 = vmatpush1.msra.mxu0 0.0
        %249 = vmatprep.subr.mxu0 0.0
        %250 = vmatpush1.msra.mxu0 0.0
        %251 = vmatprep.subr.mxu0 0.0
        %252 = vmatpush1.msra.mxu0 0.0
        %253 = vmatprep.subr.mxu0 0.0
        %254 = vmatpush1.msra.mxu0 0.0
        %255 = vmatprep.subr.mxu0 0.0
        %256 = vmatpush1.msra.mxu0 0.0
        %257 = vmatprep.subr.mxu0 0.0
        %258 = vmatpush1.msra.mxu0 0.0
        %259 = vmatprep.subr.mxu0 0.0
        %260 = vmatpush1.msra.mxu0 0.0
        %261 = vmatprep.subr.mxu0 0.0
        %262 = vmatpush1.msra.mxu0 0.0
        %263 = vmatprep.subr.mxu0 0.0
        %264 = vmatpush1.msra.mxu0 0.0
        %265 = vmatprep.subr.mxu0 0.0
        %266 = vmatpush1.msra.mxu0 0.0
        %267 = vmatprep.subr.mxu0 0.0
        %268 = vmatpush1.msra.mxu0 0.0
        %269 = vmatprep.subr.mxu0 0.0
        %270 = vmatpush1.msra.mxu0 0.0
        %271 = vmatprep.subr.mxu0 0.0
        %272 = vmatpush1.msra.mxu0 0.0
        %273 = vmatprep.subr.mxu0 0.0
        %274 = vmatpush1.msra.mxu0 0.0
        %275 = vmatprep.subr.mxu0 0.0
        %276 = vmatpush1.msra.mxu0 0.0
        %277 = vmatprep.subr.mxu0 0.0
        %278 = vmatpush1.msra.mxu0 0.0
        %279 = vmatprep.subr.mxu0 0.0
        %280 = vmatpush1.msra.mxu0 0.0
        %281 = vmatprep.subr.mxu0 0.0
        %282 = vmatpush1.msra.mxu0 0.0
        %283 = vmatprep.subr.mxu0 0.0
        %284 = vmatpush1.msra.mxu0 0.0
        %285 = vmatprep.subr.mxu0 0.0
        %286 = vmatpush1.msra.mxu0 0.0
        %287 = vmatprep.subr.mxu0 0.0
        %288 = vmatpush1.msra.mxu0 0.0
        %289 = vmatprep.subr.mxu0 0.0
        %290 = vmatpush1.msra.mxu0 0.0
        %291 = vmatprep.subr.mxu0 0.0
        %292 = vmatpush1.msra.mxu0 0.0
        %293 = vmatprep.subr.mxu0 0.0
        %294 = vmatpush1.msra.mxu0 0.0
        %295 = vmatprep.mubr.f32.mxu0 0.0
        %296 = vmatmul.mubr.f32.gmra.mrb[0].mxu0 %v223
        %v297 = vpop.f32.mrb[0].mxu0
        %v298 = vadd.f32 0.0, %v297
        %v299 = vpop.f32.mrb[0].mxu0
        %300 = vmatprep.mubr.f32.mxu0 0.0
        %301 = vmatmul.mubr.f32.gmra.mrb[0].mxu0 %v225
        %v302 = vpop.f32.mrb[0].mxu0
        %v303 = vadd.f32 0.0, %v302
        %v304 = vpop.f32.mrb[0].mxu0
        %305 = vmatprep.mubr.f32.mxu0 0.0
        %306 = vmatmul.mubr.f32.gmra.mrb[0].mxu0 %v227
        %v307 = vpop.f32.mrb[0].mxu0
        %v308 = vadd.f32 0.0, %v307
        %v309 = vpop.f32.mrb[0].mxu0
        %310 = vmatprep.mubr.f32.mxu0 0.0
        %311 = vmatmul.mubr.f32.gmra.mrb[0].mxu0 %v229
        %v312 = vpop.f32.mrb[0].mxu0
        %v313 = vadd.f32 0.0, %v312
        %v314 = vpop.f32.mrb[0].mxu0
        %315 = vdwg.mxu0
        %v316 = vmul.f32 %v177, %v198
        %v317 = vmul.f32 %v178, %v200
        %v318 = vmul.f32 %v179, %v202
        %v319 = vmul.f32 %v180, %v204
        %v320 = vmul.f32 %v316, 1.6766355
        %v321 = vmul.f32 %v317, 1.6766355
        %v322 = vmul.f32 %v318, 1.6766355
        %v323 = vmul.f32 %v319, 1.6766355
        %324 = vst.msk [vmem:[%s174] sm:$0xff] %vm222, %v320
        %325 = vst.msk [vmem:[%s174 + $0x8] sm:$0xff] %vm222, %v321
        %326 = vst.msk [vmem:[%s174 + $0x10] sm:$0xff] %vm222, %v322
        %327 = vst.msk [vmem:[%s174 + $0x18] sm:$0xff] %vm222, %v323
        %332 = vrot.lane.b32.xlu0 %v298, 16
        %v333 = vpop.permute.xlu0 %332
        %334 = vrot.lane.b32.xlu0 %v303, 16
        %v335 = vpop.permute.xlu0 %334
        %336 = vrot.lane.b32.xlu0 %v308, 16
        %v337 = vpop.permute.xlu0 %336
        %338 = vrot.lane.b32.xlu0 %v313, 16
        %v339 = vpop.permute.xlu0 %338
        %v344 = vmul.f32 %v177, %v333
        %v345 = vmul.f32 %v178, %v335
        %v346 = vmul.f32 %v179, %v337
        %v347 = vmul.f32 %v180, %v339
        %352 = vrot.lane.b32.xlu0 %v344, 120
        %v353 = vpop.permute.xlu0 %352
        %354 = vrot.lane.b32.xlu0 %v345, 120
        %v355 = vpop.permute.xlu0 %354
        %356 = vrot.lane.b32.xlu0 %v346, 120
        %v357 = vpop.permute.xlu0 %356
        %358 = vrot.lane.b32.xlu0 %v347, 120
        %v359 = vpop.permute.xlu0 %358
        %vm364 = vcmask 326720
        %365 = vst.msk [vmem:[%s174] sm:$0xff] %vm364, %v353
        %366 = vst.msk [vmem:[%s174 + $0x8] sm:$0xff] %vm364, %v355
        %367 = vst.msk [vmem:[%s174 + $0x10] sm:$0xff] %vm364, %v357
        %368 = vst.msk [vmem:[%s174 + $0x18] sm:$0xff] %vm364, %v359
        %s369 = sand.u32 %s75, 1
        %s370 = scalar_lea.sflag [#allocation4], %s369
        %s371 = sand.u32 %s75, 1
        %s372 = smul.addr %s371, 32
        %s373 = scalar_lea.vmem [#allocation7], %s372
        // Predicated region
        $region37: #{tpu_custom_call.1} parent=27 // pred_check
          %p374 = pneg %p85
        $region38: #{tpu_custom_call.1} parent=27 // pred_check_branch
          %376 = sbr.rel (%p374) target = $region40
        $region39: #{tpu_custom_call.1} parent=27 // pred_region
          %s377 = smul.u32 4, %s20
          %s379 = ssub.s32 512, 512
          %380 = vsyncadd %s370, %s379
          %s381 = smul.addr %s377, 128
          %s382 = scalar_lea.hbm %s2, %s381
          %s383 = sshll.u32 %s373, 4
          %s384 = int_to_ptr.vmem [resolvable:$true] %s383
          %389 = dma.vmem_to_hbm [thread:$0]  %s384, 512, %s382, %s370, 128, 128, 8
        $region40: #{tpu_custom_call.1} parent=27 // pred_fallthru
          _
      $region28: #{tpu_custom_call.1} parent=5 // pred_fallthru
        _
      %p390 = scmp.le.s32.totalorder 2, %s15
      // Predicated region
      $region41: #{tpu_custom_call.1} parent=5 // pred_check
        %p391 = pneg %p390
      $region42: #{tpu_custom_call.1} parent=5 // pred_check_branch
        %393 = sbr.rel (%p391) target = $region44
      $region43: #{tpu_custom_call.1} parent=5 // pred_region
        %s394 = ssub.s32 %s15, 2
        // Predicated region
        $region45: #{tpu_custom_call.1} parent=43 // pred_check
          %p395 = pneg %p91
        $region46: #{tpu_custom_call.1} parent=43 // pred_check_branch
          %397 = sbr.rel (%p395) target = $region48
        $region47: #{tpu_custom_call.1} parent=43 // pred_region
          %s398 = sand.u32 %s76, 1
          %s399 = scalar_lea.sflag [#allocation4], %s398
          %s400 = sand.u32 %s76, 1
          %s401 = smul.addr %s400, 32
          %s402 = scalar_lea.vmem [#allocation7], %s401
          %403 = dma.done %s399, 512
        $region48: #{tpu_custom_call.1} parent=43 // pred_fallthru
          _
      $region44: #{tpu_custom_call.1} parent=5 // pred_fallthru
        _
    $region6: #{tpu_custom_call.1} parent=1 // loop_footer
      %s19 = sadd.s32 1, %s15
    $region7: #{tpu_custom_call.1} parent=1 // loop_footer_branch
      %14 = sbr.rel target = $region3
    $region8: #{tpu_custom_call.1} parent=1 // loop_exit
      _
    %404 = vsyncpa [#allocation3], 1
    %s405 = scalar_lea.sflag [#allocation3], 1
    %406 = vsyncpa %s405, 1
    %407 = vsyncpa [#allocation6], 1
    %408 = vsyncpa [#allocation4], 1
    %s409 = scalar_lea.sflag [#allocation4], 1
    %410 = vsyncpa %s409, 1

</llo_original>
